<compile_context>
chip_gen: v7x
topology: tpu7x:2x2x1
jax: 0.10.0
libtpu: 0.0.40
codegen_flags: <defaults>
</compile_context>

<pallas_src>
import numpy as np
import jax
import jax.numpy as jnp
from jax.experimental import pallas as pl
from jax.experimental.pallas import tpu as pltpu


def _round_up(n, m):
    return (n + m - 1) // m * m


def latent_mapping_kernel(x_ref, w1_ref, w2_ref, p_ref, o_ref):
    # Weights / params are VMEM-resident across grid steps (constant index_map),
    # already in the desired matmul dtype (no per-step casts on them).
    w1 = w1_ref[...]                                 # (D_in, Dp)
    w2 = w2_ref[...]                                 # (Dp, Dp)
    p = p_ref[...]                                   # (4, Dp): b1, b2, bn_scale, bn_shift (f32)
    b1, b2, scale, shift = p[0:1, :], p[1:2, :], p[2:3, :], p[3:4, :]

    x = x_ref[...].astype(w1.dtype)                  # (TB, D_in)

    # fc1: MXU matmul, f32 accumulation + bias.
    h = jnp.dot(x, w1, preferred_element_type=jnp.float32) + b1

    # residual: h + relu(fc2(h))
    h2 = jnp.dot(h.astype(w2.dtype), w2, preferred_element_type=jnp.float32) + b2
    h = h + jnp.maximum(h2, 0.0)

    # BatchNorm1d (eval mode), folded to scale/shift. Padded lanes have scale=shift=0,
    # so h stays exactly 0 there and drops out of the l2-norm sum below.
    h = h * scale + shift

    # l2norm over the feature axis: h * rsqrt(sum(h^2)) — EUP rsqrt, VPU mul.
    # Clamp the sum so all-zero (padded) rows yield 0 instead of NaN.
    ssq = jnp.sum(h * h, axis=1, keepdims=True)
    inv = jax.lax.rsqrt(jnp.maximum(ssq, jnp.float32(1e-30)))
    o_ref[...] = (h * inv).astype(o_ref.dtype)


def _pick_batch_tile(B, block_b):
    """Balanced, padding-aware batch tile.

    * TB <= block_b, TB a multiple of 8 (sublane group).
    * Prefer >= 2 grid steps when B allows (v7x megacore sharding of the batch axis).
    * Bp overshoots B by at most one 8-row sublane group (no ~2x padding blowup for
      awkward batch sizes like 520).
    """
    n_tiles = max(pl.cdiv(B, block_b), 1)
    if B >= 16:
        n_tiles = max(n_tiles, 2)
    return _round_up(pl.cdiv(B, n_tiles), 8)


def latent_mapping(x, params, *, block_b=4096, matmul_dtype=jnp.bfloat16,
                   out_dtype=jnp.float32, return_padded=False):
    """Run the Latent_mapping forward pass. x: (B, D_in) f32.

    matmul_dtype: operand dtype fed to the MXU (bf16 for v6e/v7x peak, f32 for
                  tight-tolerance checking).
    out_dtype:    dtype of the stored output (bf16 halves the dominant HBM write).
    return_padded: if True, return the lane-padded (Bp, 128) buffer and skip the
                   wrapper-side slice copy (padded rows/lanes are exactly 0).
    """
    B, D_in = x.shape
    # Pre-cast weights once in the wrapper (tiny), so the kernel body does not
    # re-cast them every grid step and the VMEM-resident copies are half-size.
    w1t = params["w1t"].astype(matmul_dtype)
    w2t = params["w2t"].astype(matmul_dtype)
    pvec = params["pvec"]                      # stays f32 (bias / BN precision)
    Dp = w1t.shape[1]                          # lane-padded hidden width (multiple of 128)
    d_out = params["d_out"]                    # true hidden width (unpadded)

    TB = _pick_batch_tile(B, block_b)
    Bp = _round_up(B, TB)
    x_pad = jnp.pad(x, ((0, Bp - B), (0, 0))) if Bp != B else x
    grid = (Bp // TB,)

    w_itemsize = jnp.dtype(matmul_dtype).itemsize
    cost = pl.CostEstimate(
        flops=2 * Bp * (D_in * Dp + Dp * Dp),
        transcendentals=Bp,                                        # one rsqrt per row
        bytes_accessed=(x_pad.dtype.itemsize * Bp * D_in
                        + w_itemsize * (D_in * Dp + Dp * Dp)
                        + 4 * 4 * Dp
                        + jnp.dtype(out_dtype).itemsize * Bp * Dp),
    )

    out = pl.pallas_call(
        latent_mapping_kernel,
        out_shape=jax.ShapeDtypeStruct((Bp, Dp), out_dtype),
        grid_spec=pltpu.PrefetchScalarGridSpec(
            num_scalar_prefetch=0,
            grid=grid,
            in_specs=[
                pl.BlockSpec((TB, D_in), lambda i: (i, 0)),   # x: tiled over batch
                pl.BlockSpec((D_in, Dp), lambda i: (0, 0)),   # w1: VMEM-resident
                pl.BlockSpec((Dp, Dp), lambda i: (0, 0)),     # w2: VMEM-resident
                pl.BlockSpec((4, Dp), lambda i: (0, 0)),      # packed b1/b2/scale/shift
            ],
            out_specs=pl.BlockSpec((TB, Dp), lambda i: (i, 0)),
        ),
        compiler_params=pltpu.CompilerParams(
            dimension_semantics=("parallel",)),               # megacore batch sharding
        cost_estimate=cost,
    )(x_pad, w1t, w2t, pvec)

    if return_padded:
        return out
    return out[:B, :d_out]


def init_params(key, d_in, d_hid, eps=1e-5):
    """Xavier-uniform init matching xavier_init_fc; BN params at PyTorch defaults.

    Stores lane-padded (multiple-of-128) transposed weights for the kernel plus
    unpadded torch-layout copies for the pure-JAX reference.
    """
    k1, k2 = jax.random.split(key)
    r1 = np.sqrt(6.0) / np.sqrt(d_in + d_hid)
    r2 = np.sqrt(6.0) / np.sqrt(d_hid + d_hid)
    w1 = jax.random.uniform(k1, (d_hid, d_in), jnp.float32, -r1, r1)   # torch layout (out, in)
    w2 = jax.random.uniform(k2, (d_hid, d_hid), jnp.float32, -r2, r2)
    b1 = jnp.zeros((d_hid,), jnp.float32)
    b2 = jnp.zeros((d_hid,), jnp.float32)
    gamma = jnp.ones((d_hid,), jnp.float32)
    beta = jnp.zeros((d_hid,), jnp.float32)
    running_mean = jnp.zeros((d_hid,), jnp.float32)
    running_var = jnp.ones((d_hid,), jnp.float32)

    # Fold eval-mode BatchNorm into scale/shift (inference-constant work done once).
    bn_scale = gamma * jax.lax.rsqrt(running_var + eps)
    bn_shift = beta - running_mean * bn_scale

    d_pad = max(_round_up(d_hid, 128), 128)
    w1t = jnp.zeros((d_in, d_pad), jnp.float32).at[:, :d_hid].set(w1.T)
    w2t = jnp.zeros((d_pad, d_pad), jnp.float32).at[:d_hid, :d_hid].set(w2.T)
    pvec = jnp.zeros((4, d_pad), jnp.float32)
    pvec = pvec.at[0, :d_hid].set(b1)
    pvec = pvec.at[1, :d_hid].set(b2)
    pvec = pvec.at[2, :d_hid].set(bn_scale)   # padded lanes keep scale = 0
    pvec = pvec.at[3, :d_hid].set(bn_shift)   # padded lanes keep shift = 0

    return {
        "w1t": w1t, "w2t": w2t, "pvec": pvec, "d_out": d_hid,
        # unpadded copies for the reference
        "w1": w1, "w2": w2, "b1": b1, "b2": b2,
        "gamma": gamma, "beta": beta,
        "running_mean": running_mean, "running_var": running_var,
    }


def reference(x, p):
    """Pure-JAX f32 reference with the exact PyTorch eval-mode semantics."""
    h = x @ p["w1"].T + p["b1"]
    h2 = h @ p["w2"].T + p["b2"]
    h = h + jnp.maximum(h2, 0.0)
    h = (h - p["running_mean"]) * jax.lax.rsqrt(p["running_var"] + 1e-5) * p["gamma"] + p["beta"]
    return h / jnp.sqrt(jnp.sum(h * h, axis=1, keepdims=True))


if __name__ == "__main__":
    # mapping_layers = [32, 64, 64] -> fc1: 32->64, fc2: 64->64 (residual-compatible)
    D_IN, D_HID = 32, 64
    key = jax.random.PRNGKey(0)
    kx, kp, kx2 = jax.random.split(key, 3)
    params = init_params(kp, D_IN, D_HID)

    # --- small batch (single grid step) ---
    B = 8
    x = jax.random.normal(kx, (B, D_IN), jnp.float32)
    ref = reference(x, params)

    # f32 MXU path: tight check against the f32 reference.
    out_f32 = jax.block_until_ready(latent_mapping(x, params, matmul_dtype=jnp.float32))
    np.testing.assert_allclose(np.asarray(out_f32), np.asarray(ref), rtol=1e-5, atol=1e-5)

    # bf16-operand MXU path (v6e/v7x peak rate): looser tolerance vs f32 reference.
    # NOTE: bf16 results differ from the f32 path by up to ~1e-2 relative (fc1 output is
    # re-quantized to bf16 before fc2).
    out_bf16 = jax.block_until_ready(latent_mapping(x, params, matmul_dtype=jnp.bfloat16))
    np.testing.assert_allclose(np.asarray(out_bf16), np.asarray(ref), rtol=3e-2, atol=3e-2)

    # --- awkward batch size: exercises padding-aware TB selection + >=2 grid steps,
    # bf16 output store, and NaN-free padded rows ---
    B2 = 20
    x2 = jax.random.normal(kx2, (B2, D_IN), jnp.float32)
    ref2 = reference(x2, params)
    out2 = jax.block_until_ready(
        latent_mapping(x2, params, matmul_dtype=jnp.bfloat16, out_dtype=jnp.bfloat16))
    np.testing.assert_allclose(np.asarray(out2, dtype=np.float32), np.asarray(ref2),
                               rtol=4e-2, atol=4e-2)

    # Padded buffer path: padded rows/lanes must be exactly 0 (no NaNs).
    out2_pad = jax.block_until_ready(
        latent_mapping(x2, params, matmul_dtype=jnp.bfloat16, return_padded=True))
    assert np.isfinite(np.asarray(out2_pad)).all()
    assert np.all(np.asarray(out2_pad)[B2:, :] == 0.0)
    assert np.all(np.asarray(out2_pad)[:, D_HID:] == 0.0)

    print("KERNEL_OK")
</pallas_src>

<mosaic_0001>
module attributes {stable_mosaic.version = 11 : i64} {
  func.func @latent_mapping_kernel(%arg0: i32, %arg1: memref<8x32xf32, #tpu.memory_space<vmem>>, %arg2: memref<32x128xf32, #tpu.memory_space<vmem>>, %arg3: memref<128x128xf32, #tpu.memory_space<vmem>>, %arg4: memref<4x128xf32, #tpu.memory_space<vmem>>, %arg5: memref<8x128xf32, #tpu.memory_space<vmem>>) attributes {dimension_semantics = [#tpu.dimension_semantics<parallel>], iteration_bounds = array<i64: 1>, scalar_prefetch = 0 : i64, scratch_operands = 0 : i64, tpu.core_type = #tpu.core_type<tc>, window_params = [{transform_indices = @transform_0, window_bounds = array<i64: 8, 32>}, {pipeline_mode = #tpu.pipeline_mode<synchronous>, transform_indices = @transform_1, window_bounds = array<i64: 32, 128>}, {pipeline_mode = #tpu.pipeline_mode<synchronous>, transform_indices = @transform_2, window_bounds = array<i64: 128, 128>}, {pipeline_mode = #tpu.pipeline_mode<synchronous>, transform_indices = @transform_3, window_bounds = array<i64: 4, 128>}, {transform_indices = @transform_4, window_bounds = array<i64: 8, 128>}]} {
    %c0 = arith.constant 0 : index
    %c0_0 = arith.constant 0 : index
    %0 = vector.load %arg2[%c0, %c0_0] : memref<32x128xf32, #tpu.memory_space<vmem>>, vector<32x128xf32>
    %c0_1 = arith.constant 0 : index
    %c0_2 = arith.constant 0 : index
    %1 = vector.load %arg3[%c0_1, %c0_2] : memref<128x128xf32, #tpu.memory_space<vmem>>, vector<128x128xf32>
    %c0_3 = arith.constant 0 : index
    %c0_4 = arith.constant 0 : index
    %2 = vector.load %arg4[%c0_3, %c0_4] : memref<4x128xf32, #tpu.memory_space<vmem>>, vector<4x128xf32>
    %3 = vector.extract_strided_slice %2 {offsets = [0, 0], sizes = [1, 128], strides = [1, 1]} : vector<4x128xf32> to vector<1x128xf32>
    %4 = vector.extract_strided_slice %2 {offsets = [1, 0], sizes = [1, 128], strides = [1, 1]} : vector<4x128xf32> to vector<1x128xf32>
    %5 = vector.extract_strided_slice %2 {offsets = [2, 0], sizes = [1, 128], strides = [1, 1]} : vector<4x128xf32> to vector<1x128xf32>
    %6 = vector.extract_strided_slice %2 {offsets = [3, 0], sizes = [1, 128], strides = [1, 1]} : vector<4x128xf32> to vector<1x128xf32>
    %c0_5 = arith.constant 0 : index
    %c0_6 = arith.constant 0 : index
    %7 = vector.load %arg1[%c0_5, %c0_6] : memref<8x32xf32, #tpu.memory_space<vmem>>, vector<8x32xf32>
    %cst = arith.constant dense<0.000000e+00> : vector<8x128xf32>
    %8 = tpu.matmul %7, %0, %cst {dimension_numbers = #tpu.dot_dimension_numbers<[1], [0], [0], [1], [0, 0, 1, 1], [], []>} : vector<8x32xf32>, vector<32x128xf32>, vector<8x128xf32> -> vector<8x128xf32>
    %9 = vector.broadcast %3 : vector<1x128xf32> to vector<8x128xf32>
    %10 = arith.addf %8, %9 : vector<8x128xf32>
    %cst_7 = arith.constant dense<0.000000e+00> : vector<8x128xf32>
    %11 = tpu.matmul %10, %1, %cst_7 {dimension_numbers = #tpu.dot_dimension_numbers<[1], [0], [0], [1], [0, 0, 1, 1], [], []>} : vector<8x128xf32>, vector<128x128xf32>, vector<8x128xf32> -> vector<8x128xf32>
    %12 = vector.broadcast %4 : vector<1x128xf32> to vector<8x128xf32>
    %13 = arith.addf %11, %12 : vector<8x128xf32>
    %cst_8 = arith.constant 0.000000e+00 : f32
    %14 = vector.broadcast %cst_8 : f32 to vector<8x128xf32>
    %15 = arith.maximumf %13, %14 : vector<8x128xf32>
    %16 = arith.addf %10, %15 : vector<8x128xf32>
    %17 = vector.broadcast %5 : vector<1x128xf32> to vector<8x128xf32>
    %18 = arith.mulf %16, %17 : vector<8x128xf32>
    %19 = vector.broadcast %6 : vector<1x128xf32> to vector<8x128xf32>
    %20 = arith.addf %18, %19 : vector<8x128xf32>
    %21 = arith.mulf %20, %20 : vector<8x128xf32>
    %cst_9 = arith.constant dense<0.000000e+00> : vector<8xf32>
    %22 = vector.multi_reduction <add>, %21, %cst_9 [1] : vector<8x128xf32> to vector<8xf32>
    %23 = vector.shape_cast %22 : vector<8xf32> to vector<8x1xf32>
    %cst_10 = arith.constant 1.000000e-30 : f32
    %24 = vector.broadcast %cst_10 : f32 to vector<8x1xf32>
    %25 = arith.maximumf %23, %24 : vector<8x1xf32>
    %26 = math.rsqrt %25 : vector<8x1xf32>
    %27 = vector.broadcast %26 : vector<8x1xf32> to vector<8x128xf32>
    %28 = arith.mulf %20, %27 : vector<8x128xf32>
    %c0_11 = arith.constant 0 : index
    %c0_12 = arith.constant 0 : index
    %29 = vector.load %arg5[%c0_11, %c0_12] : memref<8x128xf32, #tpu.memory_space<vmem>>, vector<8x128xf32>
    tpu.vector_store %arg5[%c0_11, %c0_12], %28 {strides = array<i32>} : memref<8x128xf32, #tpu.memory_space<vmem>>, vector<8x128xf32>,
    return
  }
  func.func @transform_0(%arg0: i32) -> (i32, i32) {
    %c0_i32 = arith.constant 0 : i32
    %c0_i32_0 = arith.constant 0 : i32
    return %arg0, %c0_i32 : i32, i32
  }
  func.func @transform_1(%arg0: i32) -> (i32, i32) {
    %c0_i32 = arith.constant 0 : i32
    %c0_i32_0 = arith.constant 0 : i32
    %c0_i32_1 = arith.constant 0 : i32
    return %c0_i32, %c0_i32_0 : i32, i32
  }
  func.func @transform_2(%arg0: i32) -> (i32, i32) {
    %c0_i32 = arith.constant 0 : i32
    %c0_i32_0 = arith.constant 0 : i32
    %c0_i32_1 = arith.constant 0 : i32
    return %c0_i32, %c0_i32_0 : i32, i32
  }
  func.func @transform_3(%arg0: i32) -> (i32, i32) {
    %c0_i32 = arith.constant 0 : i32
    %c0_i32_0 = arith.constant 0 : i32
    %c0_i32_1 = arith.constant 0 : i32
    return %c0_i32, %c0_i32_0 : i32, i32
  }
  func.func @transform_4(%arg0: i32) -> (i32, i32) {
    %c0_i32 = arith.constant 0 : i32
    %c0_i32_0 = arith.constant 0 : i32
    return %arg0, %c0_i32 : i32, i32
  }
}

</mosaic_0001>

<llo_original>
// kernel: tpu_custom_call.1
$region0: #{tpu_custom_call.1}
  #allocation0 [shape = 'u32[]', space=smem, size = 0x4, offset = 0x4, fixed_abs, tag = 'smem constant byte address 0x4 - core index']
  #allocation1 [shape = 'u32[144,128]{1,0:T(1,128)}', space=vmem, size = 0x12000, scoped, tag = 'internal scratch']
  %s0 = inlined_call_operand.hbm [shape: f32[8,32], index: 0, kind: input, shape index: {}]
  %s1 = inlined_call_operand.hbm [shape: f32[32,128], index: 1, kind: input, shape index: {}]
  %s2 = inlined_call_operand.hbm [shape: f32[128,128], index: 2, kind: input, shape index: {}]
  %s3 = inlined_call_operand.vmem [shape: f32[4,128], index: 3, kind: input, shape index: {}]
  %s4 = inlined_call_operand.hbm [shape: f32[8,128], index: 4, kind: output, shape index: {}]
  %s5 = sld [smem:[#allocation0]]
  $region38: #{tpu_custom_call.1} parent=0
    _
  %s7 = ssub.s32 1, %s5
  %s8 = scalar_select 0, %s7, %s5
  $region1: #{tpu_custom_call.1} parent=0
    #allocation2 [shape = 'u8[4096]{0}', space=vmem, size = 0x1000, scoped, tag = 'input window, operand 0, single buffered']
    #allocation3 [shape = 's32[1]{0}', space=sflag, size = 0x4, scoped, tag = 'scoped memory for tpu_custom_call.1']
    #allocation4 [shape = 's32[1]{0}', space=sflag, size = 0x4, scoped, tag = 'scoped memory for tpu_custom_call.1']
    #allocation5 [shape = 'u8[16384]{0}', space=vmem, size = 0x4000, scoped, tag = 'input window, operand 1, single buffered']
    #allocation6 [shape = 's32[1]{0}', space=sflag, size = 0x4, scoped, tag = 'scoped memory for tpu_custom_call.1']
    #allocation7 [shape = 'u8[65536]{0}', space=vmem, size = 0x10000, scoped, tag = 'input window, operand 2, single buffered']
    #allocation8 [shape = 'u8[4096]{0}', space=vmem, size = 0x1000, scoped, tag = 'output window, operand 0, single buffered']
    %9 = vsyncpa [#allocation3], 0
    %10 = vsyncpa [#allocation6], 0
    %11 = vsyncpa [#allocation4], 0
    // Predicated region
    $region2: #{tpu_custom_call.1} parent=1 // pred_check
      _
    $region3: #{tpu_custom_call.1} parent=1 // pred_check_branch
      %13 = sbr.rel (0) target = $region5
    $region4: #{tpu_custom_call.1} parent=1 // pred_region
      %s15 = ssub.s32 128, 128
      %16 = vsyncadd [#allocation3], %s15
      %s18 = sshll.u32 [#allocation2], 4
      %s19 = int_to_ptr.vmem [resolvable:$true] %s18
      %21 = dma.hbm_to_vmem [thread:$0]  %s0, 128, %s19, [#allocation3]
    $region5: #{tpu_custom_call.1} parent=1 // pred_fallthru
      _
    // Predicated region
    $region6: #{tpu_custom_call.1} parent=1 // pred_check
      _
    $region7: #{tpu_custom_call.1} parent=1 // pred_check_branch
      %23 = sbr.rel (0) target = $region9
    $region8: #{tpu_custom_call.1} parent=1 // pred_region
      %s25 = ssub.s32 512, 512
      %26 = vsyncadd [#allocation6], %s25
      %s27 = sshll.u32 [#allocation5], 4
      %s28 = int_to_ptr.vmem [resolvable:$true] %s27
      %33 = dma.hbm_to_vmem [thread:$0]  %s1, 512, %s28, [#allocation6], 128, 128, 8
    $region9: #{tpu_custom_call.1} parent=1 // pred_fallthru
      _
    // Predicated region
    $region10: #{tpu_custom_call.1} parent=1 // pred_check
      _
    $region11: #{tpu_custom_call.1} parent=1 // pred_check_branch
      %35 = sbr.rel (0) target = $region13
    $region12: #{tpu_custom_call.1} parent=1 // pred_region
      %s37 = ssub.s32 2048, 2048
      %38 = vsyncadd [#allocation6], %s37
      %s39 = sshll.u32 [#allocation7], 4
      %s40 = int_to_ptr.vmem [resolvable:$true] %s39
      %45 = dma.hbm_to_vmem [thread:$0]  %s2, 2048, %s40, [#allocation6], 128, 128, 8
    $region13: #{tpu_custom_call.1} parent=1 // pred_fallthru
      _
    // Predicated region
    $region14: #{tpu_custom_call.1} parent=1 // pred_check
      _
    $region15: #{tpu_custom_call.1} parent=1 // pred_check_branch
      %47 = sbr.rel (0) target = $region17
    $region16: #{tpu_custom_call.1} parent=1 // pred_region
      _
    $region17: #{tpu_custom_call.1} parent=1 // pred_fallthru
      _
    // Predicated region
    $region18: #{tpu_custom_call.1} parent=1 // pred_check
      _
    $region19: #{tpu_custom_call.1} parent=1 // pred_check_branch
      %49 = sbr.rel (0) target = $region21
    $region20: #{tpu_custom_call.1} parent=1 // pred_region
      %50 = dma.done [#allocation3], 128
    $region21: #{tpu_custom_call.1} parent=1 // pred_fallthru
      _
    // Predicated region
    $region22: #{tpu_custom_call.1} parent=1 // pred_check
      _
    $region23: #{tpu_custom_call.1} parent=1 // pred_check_branch
      %52 = sbr.rel (0) target = $region25
    $region24: #{tpu_custom_call.1} parent=1 // pred_region
      %53 = dma.done [#allocation6], 512
    $region25: #{tpu_custom_call.1} parent=1 // pred_fallthru
      _
    // Predicated region
    $region26: #{tpu_custom_call.1} parent=1 // pred_check
      _
    $region27: #{tpu_custom_call.1} parent=1 // pred_check_branch
      %55 = sbr.rel (0) target = $region29
    $region28: #{tpu_custom_call.1} parent=1 // pred_region
      %56 = dma.done [#allocation6], 2048
    $region29: #{tpu_custom_call.1} parent=1 // pred_fallthru
      _
    %v57 = vld [vmem:[#allocation5] sm:$0xff]
    %v58 = vld [vmem:[#allocation5 + $0x8] sm:$0xff]
    %v59 = vld [vmem:[#allocation5 + $0x10] sm:$0xff]
    %v60 = vld [vmem:[#allocation5 + $0x18] sm:$0xff]
    %v61 = vld [vmem:[#allocation7] sm:$0xff]
    %v62 = vld [vmem:[#allocation7 + $0x8] sm:$0xff]
    %v63 = vld [vmem:[#allocation7 + $0x10] sm:$0xff]
    %v64 = vld [vmem:[#allocation7 + $0x18] sm:$0xff]
    %v65 = vld [vmem:[#allocation7 + $0x20] sm:$0xff]
    %v66 = vld [vmem:[#allocation7 + $0x28] sm:$0xff]
    %v67 = vld [vmem:[#allocation7 + $0x30] sm:$0xff]
    %v68 = vld [vmem:[#allocation7 + $0x38] sm:$0xff]
    %v69 = vld [vmem:[#allocation7 + $0x40] sm:$0xff]
    %v70 = vld [vmem:[#allocation7 + $0x48] sm:$0xff]
    %v71 = vld [vmem:[#allocation7 + $0x50] sm:$0xff]
    %v72 = vld [vmem:[#allocation7 + $0x58] sm:$0xff]
    %v73 = vld [vmem:[#allocation7 + $0x60] sm:$0xff]
    %v74 = vld [vmem:[#allocation7 + $0x68] sm:$0xff]
    %v75 = vld [vmem:[#allocation7 + $0x70] sm:$0xff]
    %v76 = vld [vmem:[#allocation7 + $0x78] sm:$0xff]
    %v77 = vld [vmem:[%s3] sm:$0xf]
    %v78 = vld [vmem:[#allocation2] sm:$0xff]
    %v79 = vlaneseq
    %v80 = vshrl.u32 %v79, 7
    %v81 = vsub.s32 0, %v80
    %v82 = vrot.slane %v77, %v81
    %vm83 = vcmask 261120
    %v85 = vsel %vm83, %v78, 0
    %87 = vmatprep.subr.mxu0 0.0
    %88 = vmatpush1.msra.mxu0 %v57
    %89 = vmatprep.subr.mxu0 0.0
    %90 = vmatpush1.msra.mxu0 %v58
    %91 = vmatprep.subr.mxu0 0.0
    %92 = vmatpush1.msra.mxu0 %v59
    %93 = vmatprep.subr.mxu0 0.0
    %94 = vmatpush1.msra.mxu0 %v60
    %95 = vmatprep.subr.mxu0 0.0
    %96 = vmatpush1.msra.mxu0 0.0
    %97 = vmatprep.subr.mxu0 0.0
    %98 = vmatpush1.msra.mxu0 0.0
    %99 = vmatprep.subr.mxu0 0.0
    %100 = vmatpush1.msra.mxu0 0.0
    %101 = vmatprep.subr.mxu0 0.0
    %102 = vmatpush1.msra.mxu0 0.0
    %103 = vmatprep.subr.mxu0 0.0
    %104 = vmatpush1.msra.mxu0 0.0
    %105 = vmatprep.subr.mxu0 0.0
    %106 = vmatpush1.msra.mxu0 0.0
    %107 = vmatprep.subr.mxu0 0.0
    %108 = vmatpush1.msra.mxu0 0.0
    %109 = vmatprep.subr.mxu0 0.0
    %110 = vmatpush1.msra.mxu0 0.0
    %111 = vmatprep.subr.mxu0 0.0
    %112 = vmatpush1.msra.mxu0 0.0
    %113 = vmatprep.subr.mxu0 0.0
    %114 = vmatpush1.msra.mxu0 0.0
    %115 = vmatprep.subr.mxu0 0.0
    %116 = vmatpush1.msra.mxu0 0.0
    %117 = vmatprep.subr.mxu0 0.0
    %118 = vmatpush1.msra.mxu0 0.0
    %119 = vmatprep.subr.mxu0 0.0
    %120 = vmatpush1.msra.mxu0 0.0
    %121 = vmatprep.subr.mxu0 0.0
    %122 = vmatpush1.msra.mxu0 0.0
    %123 = vmatprep.subr.mxu0 0.0
    %124 = vmatpush1.msra.mxu0 0.0
    %125 = vmatprep.subr.mxu0 0.0
    %126 = vmatpush1.msra.mxu0 0.0
    %127 = vmatprep.subr.mxu0 0.0
    %128 = vmatpush1.msra.mxu0 0.0
    %129 = vmatprep.subr.mxu0 0.0
    %130 = vmatpush1.msra.mxu0 0.0
    %131 = vmatprep.subr.mxu0 0.0
    %132 = vmatpush1.msra.mxu0 0.0
    %133 = vmatprep.subr.mxu0 0.0
    %134 = vmatpush1.msra.mxu0 0.0
    %135 = vmatprep.subr.mxu0 0.0
    %136 = vmatpush1.msra.mxu0 0.0
    %137 = vmatprep.subr.mxu0 0.0
    %138 = vmatpush1.msra.mxu0 0.0
    %139 = vmatprep.subr.mxu0 0.0
    %140 = vmatpush1.msra.mxu0 0.0
    %141 = vmatprep.subr.mxu0 0.0
    %142 = vmatpush1.msra.mxu0 0.0
    %143 = vmatprep.subr.mxu0 0.0
    %144 = vmatpush1.msra.mxu0 0.0
    %145 = vmatprep.subr.mxu0 0.0
    %146 = vmatpush1.msra.mxu0 0.0
    %147 = vmatprep.subr.mxu0 0.0
    %148 = vmatpush1.msra.mxu0 0.0
    %149 = vmatprep.subr.mxu0 0.0
    %150 = vmatpush1.msra.mxu0 0.0
    %151 = vmatprep.mubr.f32.mxu0 0.0
    %152 = vmatmul.mubr.f32.gmra.mrb[0].mxu0 %v85
    %v153 = vpop.f32.mrb[0].mxu0
    %v154 = vadd.f32 %v82, %v153
    %v155 = vpop.f32.mrb[0].mxu0
    %156 = vdwg.mxu0
    %v157 = vlaneseq
    %v158 = vshrl.u32 %v157, 7
    %v159 = vsub.s32 1, %v158
    %v160 = vrot.slane %v77, %v159
    %161 = vmatprep.subr.mxu0 0.0
    %162 = vmatpush1.msra.mxu0 %v61
    %163 = vmatprep.subr.mxu0 0.0
    %164 = vmatpush1.msra.mxu0 %v62
    %165 = vmatprep.subr.mxu0 0.0
    %166 = vmatpush1.msra.mxu0 %v63
    %167 = vmatprep.subr.mxu0 0.0
    %168 = vmatpush1.msra.mxu0 %v64
    %169 = vmatprep.subr.mxu0 0.0
    %170 = vmatpush1.msra.mxu0 %v65
    %171 = vmatprep.subr.mxu0 0.0
    %172 = vmatpush1.msra.mxu0 %v66
    %173 = vmatprep.subr.mxu0 0.0
    %174 = vmatpush1.msra.mxu0 %v67
    %175 = vmatprep.subr.mxu0 0.0
    %176 = vmatpush1.msra.mxu0 %v68
    %177 = vmatprep.subr.mxu0 0.0
    %178 = vmatpush1.msra.mxu0 %v69
    %179 = vmatprep.subr.mxu0 0.0
    %180 = vmatpush1.msra.mxu0 %v70
    %181 = vmatprep.subr.mxu0 0.0
    %182 = vmatpush1.msra.mxu0 %v71
    %183 = vmatprep.subr.mxu0 0.0
    %184 = vmatpush1.msra.mxu0 %v72
    %185 = vmatprep.subr.mxu0 0.0
    %186 = vmatpush1.msra.mxu0 %v73
    %187 = vmatprep.subr.mxu0 0.0
    %188 = vmatpush1.msra.mxu0 %v74
    %189 = vmatprep.subr.mxu0 0.0
    %190 = vmatpush1.msra.mxu0 %v75
    %191 = vmatprep.subr.mxu0 0.0
    %192 = vmatpush1.msra.mxu0 %v76
    %193 = vmatprep.subr.mxu0 0.0
    %194 = vmatpush1.msra.mxu0 0.0
    %195 = vmatprep.subr.mxu0 0.0
    %196 = vmatpush1.msra.mxu0 0.0
    %197 = vmatprep.subr.mxu0 0.0
    %198 = vmatpush1.msra.mxu0 0.0
    %199 = vmatprep.subr.mxu0 0.0
    %200 = vmatpush1.msra.mxu0 0.0
    %201 = vmatprep.subr.mxu0 0.0
    %202 = vmatpush1.msra.mxu0 0.0
    %203 = vmatprep.subr.mxu0 0.0
    %204 = vmatpush1.msra.mxu0 0.0
    %205 = vmatprep.subr.mxu0 0.0
    %206 = vmatpush1.msra.mxu0 0.0
    %207 = vmatprep.subr.mxu0 0.0
    %208 = vmatpush1.msra.mxu0 0.0
    %209 = vmatprep.subr.mxu0 0.0
    %210 = vmatpush1.msra.mxu0 0.0
    %211 = vmatprep.subr.mxu0 0.0
    %212 = vmatpush1.msra.mxu0 0.0
    %213 = vmatprep.subr.mxu0 0.0
    %214 = vmatpush1.msra.mxu0 0.0
    %215 = vmatprep.subr.mxu0 0.0
    %216 = vmatpush1.msra.mxu0 0.0
    %217 = vmatprep.subr.mxu0 0.0
    %218 = vmatpush1.msra.mxu0 0.0
    %219 = vmatprep.subr.mxu0 0.0
    %220 = vmatpush1.msra.mxu0 0.0
    %221 = vmatprep.subr.mxu0 0.0
    %222 = vmatpush1.msra.mxu0 0.0
    %223 = vmatprep.subr.mxu0 0.0
    %224 = vmatpush1.msra.mxu0 0.0
    %225 = vmatprep.mubr.f32.mxu0 0.0
    %226 = vmatmul.mubr.f32.gmra.mrb[0].mxu0 %v154
    %v227 = vpop.f32.mrb[0].mxu0
    %v228 = vadd.f32 %v160, %v227
    %v229 = vpop.f32.mrb[0].mxu0
    %230 = vdwg.mxu0
    %v231 = vmax.f32 %v228, 0.0
    %v232 = vadd.f32 %v154, %v231
    %v233 = vlaneseq
    %v234 = vshrl.u32 %v233, 7
    %v235 = vsub.s32 2, %v234
    %v236 = vrot.slane %v77, %v235
    %v237 = vmul.f32 %v232, %v236
    %v238 = vlaneseq
    %v239 = vshrl.u32 %v238, 7
    %v240 = vsub.s32 3, %v239
    %v241 = vrot.slane %v77, %v240
    %v242 = vadd.f32 %v237, %v241
    %v243 = vmul.f32 %v242, %v242
    %244 = vadd.xlane.f32.xlu0 %v243
    %v245 = vpop.xlane.xlu0 %244
    %v246 = vmax.f32 %v245, 1e-30
    %v247 = vrsqrt.pop %v246
    %v248 = vmul.f32 %v242, %v247
    %249 = vst [vmem:[#allocation8] sm:$0xff] %v248
    // Predicated region
    $region30: #{tpu_custom_call.1} parent=1 // pred_check
      _
    $region31: #{tpu_custom_call.1} parent=1 // pred_check_branch
      %251 = sbr.rel (0) target = $region33
    $region32: #{tpu_custom_call.1} parent=1 // pred_region
      %s253 = ssub.s32 128, 128
      %254 = vsyncadd [#allocation4], %s253
      %s256 = sshll.u32 [#allocation8], 4
      %s257 = int_to_ptr.vmem [resolvable:$true] %s256
      %259 = dma.vmem_to_hbm [thread:$0]  %s257, 128, %s4, [#allocation4]
    $region33: #{tpu_custom_call.1} parent=1 // pred_fallthru
      _
    // Predicated region
    $region34: #{tpu_custom_call.1} parent=1 // pred_check
      _
    $region35: #{tpu_custom_call.1} parent=1 // pred_check_branch
      %261 = sbr.rel (0) target = $region37
    $region36: #{tpu_custom_call.1} parent=1 // pred_region
      %262 = dma.done [#allocation4], 128
    $region37: #{tpu_custom_call.1} parent=1 // pred_fallthru
      _
    %263 = vsyncpa [#allocation3], 1
    %264 = vsyncpa [#allocation6], 1
    %265 = vsyncpa [#allocation4], 1

</llo_original>
